<compile_context>
chip_gen: v5e
topology: v5e:2x2
jax: 0.10.0
libtpu: 0.0.40
codegen_flags: <defaults>
</compile_context>

<pallas_src>
import functools

import jax
import jax.numpy as jnp
from jax.experimental import pallas as pl
from jax.experimental.pallas import tpu as pltpu

LANE = 128


def _round_up(n, m):
    return ((n + m - 1) // m) * m


def _policy_kernel(x_ref, w1_ref, b1_ref, w2_ref, b2_ref, w3_ref, b3_ref, o_ref):
    # x tile: (TILE_B, state_dim) f32; weights bf16 [in, out]; biases f32 [1, out].
    x = x_ref[...].astype(jnp.bfloat16)

    # fc1 + ReLU (bf16 MXU inputs, f32 accumulation, f32 elementwise)
    h1 = jnp.dot(x, w1_ref[...], preferred_element_type=jnp.float32) + b1_ref[...]
    h1 = jnp.maximum(h1, 0.0)

    # fc2 + ReLU
    h2 = jnp.dot(h1.astype(jnp.bfloat16), w2_ref[...],
                 preferred_element_type=jnp.float32) + b2_ref[...]
    h2 = jnp.maximum(h2, 0.0)

    # fc3 + softmax over the (lane-padded) action dimension. Padded action lanes
    # carry a -1e30 bias, so exp(logit - m) == 0 there and the softmax over the
    # real actions is unchanged.
    logits = jnp.dot(h2.astype(jnp.bfloat16), w3_ref[...],
                     preferred_element_type=jnp.float32) + b3_ref[...]
    m = jnp.max(logits, axis=1, keepdims=True)
    e = jnp.exp(logits - m)
    denom = jnp.sum(e, axis=1, keepdims=True)
    # Exact divide (not approx reciprocal) so probabilities sum to 1 within
    # f32 rounding -- required for downstream Categorical sampling.
    o_ref[...] = (e / denom).astype(o_ref.dtype)


def pad_params(w1, b1, w2, b2, w3, b3):
    """Zero-pad hidden/action dims to 128 lanes; cast weights to bf16 (MXU inputs).

    Zero-padded hidden columns/rows are exact (ReLU(0)=0 contributes nothing);
    padded action lanes get a -1e30 bias so they vanish under softmax.
    Call once; pass the result to policy_net_forward.
    """
    state_dim, hidden_dim = w1.shape
    action_dim = w3.shape[1]
    hp = _round_up(hidden_dim, LANE)
    ap = _round_up(action_dim, LANE)

    def pad2(a, rows, cols, fill=0.0):
        return jnp.pad(a, ((0, rows - a.shape[0]), (0, cols - a.shape[1])),
                       constant_values=fill)

    w1p = pad2(w1, state_dim, hp).astype(jnp.bfloat16)
    b1p = pad2(b1, 1, hp).astype(jnp.float32)
    w2p = pad2(w2, hp, hp).astype(jnp.bfloat16)
    b2p = pad2(b2, 1, hp).astype(jnp.float32)
    w3p = pad2(w3, hp, ap).astype(jnp.bfloat16)
    b3p = pad2(b3.astype(jnp.float32), 1, ap, fill=-1e30)
    return w1p, b1p, w2p, b2p, w3p, b3p


@functools.partial(jax.jit, static_argnames=("action_dim", "tile_b"))
def policy_net_forward(x, w1, b1, w2, b2, w3, b3, *, action_dim, tile_b=512):
    """x: [B, state_dim] f32; params from pad_params(); returns [B, action_dim] probs."""
    B, state_dim = x.shape
    ap = w3.shape[1]          # lane-padded action dim
    hp = w2.shape[0]          # lane-padded hidden dim

    # Batch tile: multiple of 8 sublanes, no larger than the (padded) batch.
    tile_b = min(_round_up(tile_b, 8), _round_up(B, 8))
    Bp = _round_up(B, tile_b)
    if Bp != B:
        x = jnp.pad(x, ((0, Bp - B), (0, 0)))

    weight_bytes = sum(int(a.size) * a.dtype.itemsize for a in (w1, b1, w2, b2, w3, b3))
    cost = pl.CostEstimate(
        flops=2 * Bp * (state_dim * hp + hp * hp + hp * ap),
        transcendentals=Bp * ap,
        bytes_accessed=int(x.size) * 4 + Bp * ap * 4 + weight_bytes,
    )

    def full_spec(a):  # whole array, VMEM-resident across all grid steps
        return pl.BlockSpec(a.shape, lambda i: (0, 0))

    out = pl.pallas_call(
        _policy_kernel,
        out_shape=jax.ShapeDtypeStruct((Bp, ap), jnp.float32),
        grid=(Bp // tile_b,),
        in_specs=[
            pl.BlockSpec((tile_b, state_dim), lambda i: (i, 0)),
            full_spec(w1), full_spec(b1),
            full_spec(w2), full_spec(b2),
            full_spec(w3), full_spec(b3),
        ],
        out_specs=pl.BlockSpec((tile_b, ap), lambda i: (i, 0)),
        compiler_params=pltpu.CompilerParams(
            dimension_semantics=("parallel",),
            vmem_limit_bytes=32 * 1024 * 1024,
        ),
        cost_estimate=cost,
    )(x, w1, b1, w2, b2, w3, b3)

    return out[:B, :action_dim]


def init_params(key, state_dim, hidden_dim, action_dim):
    """Deterministic init mirroring nn.Linear shapes (stored transposed: [in, out])."""
    ks = jax.random.split(key, 6)

    def uniform_fan_in(k, shape, fan_in):
        bound = 1.0 / jnp.sqrt(fan_in)
        return jax.random.uniform(k, shape, jnp.float32, -bound, bound)

    w1 = uniform_fan_in(ks[0], (state_dim, hidden_dim), state_dim)
    b1 = uniform_fan_in(ks[1], (1, hidden_dim), state_dim)
    w2 = uniform_fan_in(ks[2], (hidden_dim, hidden_dim), hidden_dim)
    b2 = uniform_fan_in(ks[3], (1, hidden_dim), hidden_dim)
    w3 = uniform_fan_in(ks[4], (hidden_dim, action_dim), hidden_dim)
    b3 = uniform_fan_in(ks[5], (1, action_dim), hidden_dim)
    return w1, b1, w2, b2, w3, b3


def reference_forward_f32(x, w1, b1, w2, b2, w3, b3):
    h1 = jnp.maximum(x @ w1 + b1, 0.0)
    h2 = jnp.maximum(h1 @ w2 + b2, 0.0)
    return jax.nn.softmax(h2 @ w3 + b3, axis=1)


def reference_forward_bf16(x, w1, b1, w2, b2, w3, b3):
    """Precision-matched reference: bf16 dot inputs, f32 accumulation/elementwise."""
    bf = jnp.bfloat16
    dot = lambda a, b: jnp.dot(a.astype(bf), b.astype(bf),
                               preferred_element_type=jnp.float32)
    h1 = jnp.maximum(dot(x, w1) + b1, 0.0)
    h2 = jnp.maximum(dot(h1, w2) + b2, 0.0)
    return jax.nn.softmax(dot(h2, w3) + b3, axis=1)


if __name__ == "__main__":
    state_dim, hidden_dim, action_dim = 12, 32, 5

    key = jax.random.PRNGKey(0)
    k_x, k_p, k_x2 = jax.random.split(key, 3)
    raw_params = init_params(k_p, state_dim, hidden_dim, action_dim)
    params = pad_params(*raw_params)

    # Small, module-consistent batch.
    x = jax.random.normal(k_x, (8, state_dim), jnp.float32)
    out = policy_net_forward(x, *params, action_dim=action_dim)
    out = jax.block_until_ready(out)

    ref_bf16 = reference_forward_bf16(x, *raw_params)
    ref_f32 = reference_forward_f32(x, *raw_params)
    assert out.shape == (8, action_dim)
    assert jnp.allclose(out, ref_bf16, atol=5e-3, rtol=5e-3)
    assert jnp.allclose(out, ref_f32, atol=2e-2, rtol=2e-2)
    assert jnp.allclose(jnp.sum(out, axis=1), 1.0, atol=1e-3)

    # Larger batch exercising the multi-step pipelined grid + batch-padding path.
    x2 = jax.random.normal(k_x2, (400, state_dim), jnp.float32)
    out2 = jax.block_until_ready(
        policy_net_forward(x2, *params, action_dim=action_dim, tile_b=128))
    ref2 = reference_forward_bf16(x2, *raw_params)
    assert out2.shape == (400, action_dim)
    assert jnp.allclose(out2, ref2, atol=5e-3, rtol=5e-3)
    assert jnp.allclose(jnp.sum(out2, axis=1), 1.0, atol=1e-3)

    print("KERNEL_OK")
</pallas_src>

<mosaic_0001>
module attributes {stable_mosaic.version = 11 : i64} {
  func.func @_policy_kernel(%arg0: i32, %arg1: memref<8x12xf32, #tpu.memory_space<vmem>>, %arg2: memref<12x128xbf16, #tpu.memory_space<vmem>>, %arg3: memref<1x128xf32, #tpu.memory_space<vmem>>, %arg4: memref<128x128xbf16, #tpu.memory_space<vmem>>, %arg5: memref<1x128xf32, #tpu.memory_space<vmem>>, %arg6: memref<128x128xbf16, #tpu.memory_space<vmem>>, %arg7: memref<1x128xf32, #tpu.memory_space<vmem>>, %arg8: memref<8x128xf32, #tpu.memory_space<vmem>>) attributes {dimension_semantics = [#tpu.dimension_semantics<parallel>], iteration_bounds = array<i64: 1>, scalar_prefetch = 0 : i64, scratch_operands = 0 : i64, tpu.core_type = #tpu.core_type<tc>, window_params = [{transform_indices = @transform_0, window_bounds = array<i64: 8, 12>}, {pipeline_mode = #tpu.pipeline_mode<synchronous>, transform_indices = @transform_1, window_bounds = array<i64: 12, 128>}, {pipeline_mode = #tpu.pipeline_mode<synchronous>, transform_indices = @transform_2, window_bounds = array<i64: 1, 128>}, {pipeline_mode = #tpu.pipeline_mode<synchronous>, transform_indices = @transform_3, window_bounds = array<i64: 128, 128>}, {pipeline_mode = #tpu.pipeline_mode<synchronous>, transform_indices = @transform_4, window_bounds = array<i64: 1, 128>}, {pipeline_mode = #tpu.pipeline_mode<synchronous>, transform_indices = @transform_5, window_bounds = array<i64: 128, 128>}, {pipeline_mode = #tpu.pipeline_mode<synchronous>, transform_indices = @transform_6, window_bounds = array<i64: 1, 128>}, {transform_indices = @transform_7, window_bounds = array<i64: 8, 128>}]} {
    %c0 = arith.constant 0 : index
    %c0_0 = arith.constant 0 : index
    %0 = vector.load %arg1[%c0, %c0_0] : memref<8x12xf32, #tpu.memory_space<vmem>>, vector<8x12xf32>
    %1 = arith.truncf %0 : vector<8x12xf32> to vector<8x12xbf16>
    %c0_1 = arith.constant 0 : index
    %c0_2 = arith.constant 0 : index
    %2 = vector.load %arg2[%c0_1, %c0_2] : memref<12x128xbf16, #tpu.memory_space<vmem>>, vector<12x128xbf16>
    %cst = arith.constant dense<0.000000e+00> : vector<8x128xf32>
    %3 = tpu.matmul %1, %2, %cst {dimension_numbers = #tpu.dot_dimension_numbers<[1], [0], [0], [1], [0, 0, 1, 1], [], []>} : vector<8x12xbf16>, vector<12x128xbf16>, vector<8x128xf32> -> vector<8x128xf32>
    %c0_3 = arith.constant 0 : index
    %c0_4 = arith.constant 0 : index
    %4 = vector.load %arg3[%c0_3, %c0_4] : memref<1x128xf32, #tpu.memory_space<vmem>>, vector<1x128xf32>
    %5 = vector.broadcast %4 : vector<1x128xf32> to vector<8x128xf32>
    %6 = arith.addf %3, %5 : vector<8x128xf32>
    %cst_5 = arith.constant 0.000000e+00 : f32
    %7 = vector.broadcast %cst_5 : f32 to vector<8x128xf32>
    %8 = arith.maximumf %6, %7 : vector<8x128xf32>
    %9 = arith.truncf %8 : vector<8x128xf32> to vector<8x128xbf16>
    %c0_6 = arith.constant 0 : index
    %c0_7 = arith.constant 0 : index
    %10 = vector.load %arg4[%c0_6, %c0_7] : memref<128x128xbf16, #tpu.memory_space<vmem>>, vector<128x128xbf16>
    %cst_8 = arith.constant dense<0.000000e+00> : vector<8x128xf32>
    %11 = tpu.matmul %9, %10, %cst_8 {dimension_numbers = #tpu.dot_dimension_numbers<[1], [0], [0], [1], [0, 0, 1, 1], [], []>} : vector<8x128xbf16>, vector<128x128xbf16>, vector<8x128xf32> -> vector<8x128xf32>
    %c0_9 = arith.constant 0 : index
    %c0_10 = arith.constant 0 : index
    %12 = vector.load %arg5[%c0_9, %c0_10] : memref<1x128xf32, #tpu.memory_space<vmem>>, vector<1x128xf32>
    %13 = vector.broadcast %12 : vector<1x128xf32> to vector<8x128xf32>
    %14 = arith.addf %11, %13 : vector<8x128xf32>
    %cst_11 = arith.constant 0.000000e+00 : f32
    %15 = vector.broadcast %cst_11 : f32 to vector<8x128xf32>
    %16 = arith.maximumf %14, %15 : vector<8x128xf32>
    %17 = arith.truncf %16 : vector<8x128xf32> to vector<8x128xbf16>
    %c0_12 = arith.constant 0 : index
    %c0_13 = arith.constant 0 : index
    %18 = vector.load %arg6[%c0_12, %c0_13] : memref<128x128xbf16, #tpu.memory_space<vmem>>, vector<128x128xbf16>
    %cst_14 = arith.constant dense<0.000000e+00> : vector<8x128xf32>
    %19 = tpu.matmul %17, %18, %cst_14 {dimension_numbers = #tpu.dot_dimension_numbers<[1], [0], [0], [1], [0, 0, 1, 1], [], []>} : vector<8x128xbf16>, vector<128x128xbf16>, vector<8x128xf32> -> vector<8x128xf32>
    %c0_15 = arith.constant 0 : index
    %c0_16 = arith.constant 0 : index
    %20 = vector.load %arg7[%c0_15, %c0_16] : memref<1x128xf32, #tpu.memory_space<vmem>>, vector<1x128xf32>
    %21 = vector.broadcast %20 : vector<1x128xf32> to vector<8x128xf32>
    %22 = arith.addf %19, %21 : vector<8x128xf32>
    %cst_17 = arith.constant dense<0xFF800000> : vector<8xf32>
    %23 = vector.multi_reduction <maximumf>, %22, %cst_17 [1] : vector<8x128xf32> to vector<8xf32>
    %24 = vector.shape_cast %23 : vector<8xf32> to vector<8x1xf32>
    %25 = vector.broadcast %24 : vector<8x1xf32> to vector<8x128xf32>
    %26 = arith.subf %22, %25 : vector<8x128xf32>
    %27 = math.exp %26 : vector<8x128xf32>
    %cst_18 = arith.constant dense<0.000000e+00> : vector<8xf32>
    %28 = vector.multi_reduction <add>, %27, %cst_18 [1] : vector<8x128xf32> to vector<8xf32>
    %29 = vector.shape_cast %28 : vector<8xf32> to vector<8x1xf32>
    %30 = vector.broadcast %29 : vector<8x1xf32> to vector<8x128xf32>
    %31 = arith.divf %27, %30 : vector<8x128xf32>
    %c0_19 = arith.constant 0 : index
    %c0_20 = arith.constant 0 : index
    %32 = vector.load %arg8[%c0_19, %c0_20] : memref<8x128xf32, #tpu.memory_space<vmem>>, vector<8x128xf32>
    tpu.vector_store %arg8[%c0_19, %c0_20], %31 {strides = array<i32>} : memref<8x128xf32, #tpu.memory_space<vmem>>, vector<8x128xf32>,
    return
  }
  func.func @transform_0(%arg0: i32) -> (i32, i32) {
    %c0_i32 = arith.constant 0 : i32
    %c0_i32_0 = arith.constant 0 : i32
    return %arg0, %c0_i32 : i32, i32
  }
  func.func @transform_1(%arg0: i32) -> (i32, i32) {
    %c0_i32 = arith.constant 0 : i32
    %c0_i32_0 = arith.constant 0 : i32
    %c0_i32_1 = arith.constant 0 : i32
    return %c0_i32, %c0_i32_0 : i32, i32
  }
  func.func @transform_2(%arg0: i32) -> (i32, i32) {
    %c0_i32 = arith.constant 0 : i32
    %c0_i32_0 = arith.constant 0 : i32
    %c0_i32_1 = arith.constant 0 : i32
    return %c0_i32, %c0_i32_0 : i32, i32
  }
  func.func @transform_3(%arg0: i32) -> (i32, i32) {
    %c0_i32 = arith.constant 0 : i32
    %c0_i32_0 = arith.constant 0 : i32
    %c0_i32_1 = arith.constant 0 : i32
    return %c0_i32, %c0_i32_0 : i32, i32
  }
  func.func @transform_4(%arg0: i32) -> (i32, i32) {
    %c0_i32 = arith.constant 0 : i32
    %c0_i32_0 = arith.constant 0 : i32
    %c0_i32_1 = arith.constant 0 : i32
    return %c0_i32, %c0_i32_0 : i32, i32
  }
  func.func @transform_5(%arg0: i32) -> (i32, i32) {
    %c0_i32 = arith.constant 0 : i32
    %c0_i32_0 = arith.constant 0 : i32
    %c0_i32_1 = arith.constant 0 : i32
    return %c0_i32, %c0_i32_0 : i32, i32
  }
  func.func @transform_6(%arg0: i32) -> (i32, i32) {
    %c0_i32 = arith.constant 0 : i32
    %c0_i32_0 = arith.constant 0 : i32
    %c0_i32_1 = arith.constant 0 : i32
    return %c0_i32, %c0_i32_0 : i32, i32
  }
  func.func @transform_7(%arg0: i32) -> (i32, i32) {
    %c0_i32 = arith.constant 0 : i32
    %c0_i32_0 = arith.constant 0 : i32
    return %arg0, %c0_i32 : i32, i32
  }
}

</mosaic_0001>

<llo_original>
// kernel: policy_net_forward.1
$region0: #{policy_net_forward.1}
  #allocation0 [shape = 'u32[]', space=smem, size = 0x4, offset = 0x4, fixed_abs, tag = 'smem constant byte address 0x4 - core index']
  #allocation1 [shape = 'u32[72,128]{1,0:T(1,128)}', space=vmem, size = 0x9000, scoped, tag = 'internal scratch']
  %s0 = inlined_call_operand.hbm [shape: f32[8,12], index: 0, kind: input, shape index: {}]
  %s1 = inlined_call_operand.hbm [shape: bf16[12,128], index: 1, kind: input, shape index: {}]
  %s2 = inlined_call_operand.vmem [shape: f32[1,128], index: 2, kind: input, shape index: {}]
  %s3 = inlined_call_operand.hbm [shape: bf16[128,128], index: 3, kind: input, shape index: {}]
  %s4 = inlined_call_operand.vmem [shape: f32[1,128], index: 4, kind: input, shape index: {}]
  %s5 = inlined_call_operand.hbm [shape: bf16[128,128], index: 5, kind: input, shape index: {}]
  %s6 = inlined_call_operand.vmem [shape: f32[1,128], index: 6, kind: input, shape index: {}]
  %s7 = inlined_call_operand.hbm [shape: f32[8,128], index: 7, kind: output, shape index: {}]
  %s8 = sld [smem:[#allocation0]]
  $region54: #{policy_net_forward.1} parent=0
    _
  %s10 = ssub.s32 1, %s8
  %s11 = scalar_select 0, %s10, %s8
  $region1: #{policy_net_forward.1} parent=0
    #allocation2 [shape = 'u8[4096]{0}', space=vmem, size = 0x1000, scoped, tag = 'input window, operand 0, single buffered']
    #allocation3 [shape = 's32[1]{0}', space=sflag, size = 0x4, scoped, tag = 'scoped memory for policy_net_forward.1']
    #allocation4 [shape = 's32[1]{0}', space=sflag, size = 0x4, scoped, tag = 'scoped memory for policy_net_forward.1']
    #allocation5 [shape = 'u8[4096]{0}', space=vmem, size = 0x1000, scoped, tag = 'input window, operand 1, single buffered']
    #allocation6 [shape = 's32[1]{0}', space=sflag, size = 0x4, scoped, tag = 'scoped memory for policy_net_forward.1']
    #allocation7 [shape = 'u8[32768]{0}', space=vmem, size = 0x8000, scoped, tag = 'input window, operand 3, single buffered']
    #allocation8 [shape = 'u8[32768]{0}', space=vmem, size = 0x8000, scoped, tag = 'input window, operand 5, single buffered']
    #allocation9 [shape = 's32[1]{0}', space=sflag, size = 0x4, scoped, tag = 'scoped memory for policy_net_forward.1']
    #allocation10 [shape = 'u8[4096]{0}', space=vmem, size = 0x1000, scoped, tag = 'output window, operand 0, single buffered']
    %12 = vsyncpa [#allocation3], 0
    %13 = vsyncpa [#allocation6], 0
    %14 = vsyncpa [#allocation9], 0
    %15 = vsyncpa [#allocation4], 0
    // Predicated region
    $region2: #{policy_net_forward.1} parent=1 // pred_check
      _
    $region3: #{policy_net_forward.1} parent=1 // pred_check_branch
      %17 = sbr.rel (0) target = $region5
    $region4: #{policy_net_forward.1} parent=1 // pred_region
      %19 = vsyncadd [#allocation3], 0
      %s21 = sshll.u32 %s0, 4
      %s22 = int_to_ptr.hbm [resolvable:$true] %s21
      %s23 = sshll.u32 [#allocation2], 4
      %s24 = int_to_ptr.vmem [resolvable:$true] %s23
      %26 = dma.hbm_to_vmem [thread:$0]  %s22, 128, %s24, [#allocation3]
    $region5: #{policy_net_forward.1} parent=1 // pred_fallthru
      _
    // Predicated region
    $region6: #{policy_net_forward.1} parent=1 // pred_check
      _
    $region7: #{policy_net_forward.1} parent=1 // pred_check_branch
      %28 = sbr.rel (0) target = $region9
    $region8: #{policy_net_forward.1} parent=1 // pred_region
      %30 = vsyncadd [#allocation6], 0
      %s31 = sshll.u32 %s1, 4
      %s32 = int_to_ptr.hbm [resolvable:$true] %s31
      %s33 = sshll.u32 [#allocation5], 4
      %s34 = int_to_ptr.vmem [resolvable:$true] %s33
      %39 = dma.hbm_to_vmem [thread:$0]  %s32, 128, %s34, [#allocation6], 64, 64, 4
    $region9: #{policy_net_forward.1} parent=1 // pred_fallthru
      _
    // Predicated region
    $region10: #{policy_net_forward.1} parent=1 // pred_check
      _
    $region11: #{policy_net_forward.1} parent=1 // pred_check_branch
      %41 = sbr.rel (0) target = $region13
    $region12: #{policy_net_forward.1} parent=1 // pred_region
      _
    $region13: #{policy_net_forward.1} parent=1 // pred_fallthru
      _
    // Predicated region
    $region14: #{policy_net_forward.1} parent=1 // pred_check
      _
    $region15: #{policy_net_forward.1} parent=1 // pred_check_branch
      %43 = sbr.rel (0) target = $region17
    $region16: #{policy_net_forward.1} parent=1 // pred_region
      %45 = vsyncadd [#allocation6], 0
      %s46 = sshll.u32 %s3, 4
      %s47 = int_to_ptr.hbm [resolvable:$true] %s46
      %s48 = sshll.u32 [#allocation7], 4
      %s49 = int_to_ptr.vmem [resolvable:$true] %s48
      %54 = dma.hbm_to_vmem [thread:$0]  %s47, 1024, %s49, [#allocation6], 64, 64, 4
    $region17: #{policy_net_forward.1} parent=1 // pred_fallthru
      _
    // Predicated region
    $region18: #{policy_net_forward.1} parent=1 // pred_check
      _
    $region19: #{policy_net_forward.1} parent=1 // pred_check_branch
      %56 = sbr.rel (0) target = $region21
    $region20: #{policy_net_forward.1} parent=1 // pred_region
      _
    $region21: #{policy_net_forward.1} parent=1 // pred_fallthru
      _
    // Predicated region
    $region22: #{policy_net_forward.1} parent=1 // pred_check
      _
    $region23: #{policy_net_forward.1} parent=1 // pred_check_branch
      %58 = sbr.rel (0) target = $region25
    $region24: #{policy_net_forward.1} parent=1 // pred_region
      %60 = vsyncadd [#allocation9], 0
      %s61 = sshll.u32 %s5, 4
      %s62 = int_to_ptr.hbm [resolvable:$true] %s61
      %s63 = sshll.u32 [#allocation8], 4
      %s64 = int_to_ptr.vmem [resolvable:$true] %s63
      %69 = dma.hbm_to_vmem [thread:$0]  %s62, 1024, %s64, [#allocation9], 64, 64, 4
    $region25: #{policy_net_forward.1} parent=1 // pred_fallthru
      _
    // Predicated region
    $region26: #{policy_net_forward.1} parent=1 // pred_check
      _
    $region27: #{policy_net_forward.1} parent=1 // pred_check_branch
      %71 = sbr.rel (0) target = $region29
    $region28: #{policy_net_forward.1} parent=1 // pred_region
      _
    $region29: #{policy_net_forward.1} parent=1 // pred_fallthru
      _
    // Predicated region
    $region30: #{policy_net_forward.1} parent=1 // pred_check
      _
    $region31: #{policy_net_forward.1} parent=1 // pred_check_branch
      %73 = sbr.rel (0) target = $region33
    $region32: #{policy_net_forward.1} parent=1 // pred_region
      %75 = dma.done [#allocation3], 128
    $region33: #{policy_net_forward.1} parent=1 // pred_fallthru
      _
    // Predicated region
    $region34: #{policy_net_forward.1} parent=1 // pred_check
      _
    $region35: #{policy_net_forward.1} parent=1 // pred_check_branch
      %77 = sbr.rel (0) target = $region37
    $region36: #{policy_net_forward.1} parent=1 // pred_region
      %79 = dma.done [#allocation6], 128
    $region37: #{policy_net_forward.1} parent=1 // pred_fallthru
      _
    // Predicated region
    $region38: #{policy_net_forward.1} parent=1 // pred_check
      _
    $region39: #{policy_net_forward.1} parent=1 // pred_check_branch
      %81 = sbr.rel (0) target = $region41
    $region40: #{policy_net_forward.1} parent=1 // pred_region
      %83 = dma.done [#allocation6], 1024
    $region41: #{policy_net_forward.1} parent=1 // pred_fallthru
      _
    // Predicated region
    $region42: #{policy_net_forward.1} parent=1 // pred_check
      _
    $region43: #{policy_net_forward.1} parent=1 // pred_check_branch
      %85 = sbr.rel (0) target = $region45
    $region44: #{policy_net_forward.1} parent=1 // pred_region
      %87 = dma.done [#allocation9], 1024
    $region45: #{policy_net_forward.1} parent=1 // pred_fallthru
      _
    %v89 = vld [vmem:[#allocation2] sm:$0xff]
    %v90 = vpack.c.bf16 %v89, %v89
    %v91 = vld [vmem:[#allocation5] sm:$0xf]
    %v92 = vld [vmem:[#allocation5 + $0x4] sm:$0x3]
    %v93 = vld [vmem:[%s2] sm:$0x1]
    %v95 = vperm.slane %v93, 0
    %v99 = vunpack.c.l.b16 %v91
    %v100 = vunpack.c.l.b16 %v92
    %v101 = vpack.c.b16 %v100, %v99
    %vm102 = vcmask 97280
    %v104 = vsel %vm102, %v90, 0
    %vm106 = vcmask 1045504
    %v108 = vsel %vm106, %v101, 0
    %110 = vmatpush.bf16.msra.mxu0 0
    %111 = vmatpush.bf16.msra.mxu0 0
    %112 = vmatpush.bf16.msra.mxu0 0
    %113 = vmatpush.bf16.msra.mxu0 0
    %114 = vmatpush.bf16.msra.mxu0 0
    %115 = vmatpush.bf16.msra.mxu0 0
    %116 = vmatpush.bf16.msra.mxu0 0
    %117 = vmatpush.bf16.msra.mxu0 %v108
    %118 = vmatmul.bf16.gmra.mxu0 %v104
    %v119 = vpop.f32.mrf.mxu0
    %v120 = vadd.f32 %v95, %v119
    %v121 = vpop.f32.mrf.mxu0
    %122 = vdwg.mxu0
    %v123 = vmax.f32 %v120, 0.0
    %v124 = vpack.c.bf16 %v123, %v123
    %v125 = vld [vmem:[#allocation7] sm:$0xf]
    %v126 = vld [vmem:[#allocation7 + $0x4] sm:$0xf]
    %v127 = vld [vmem:[#allocation7 + $0x8] sm:$0xf]
    %v128 = vld [vmem:[#allocation7 + $0xc] sm:$0xf]
    %v129 = vld [vmem:[#allocation7 + $0x10] sm:$0xf]
    %v130 = vld [vmem:[#allocation7 + $0x14] sm:$0xf]
    %v131 = vld [vmem:[#allocation7 + $0x18] sm:$0xf]
    %v132 = vld [vmem:[#allocation7 + $0x1c] sm:$0xf]
    %v133 = vld [vmem:[#allocation7 + $0x20] sm:$0xf]
    %v134 = vld [vmem:[#allocation7 + $0x24] sm:$0xf]
    %v135 = vld [vmem:[#allocation7 + $0x28] sm:$0xf]
    %v136 = vld [vmem:[#allocation7 + $0x2c] sm:$0xf]
    %v137 = vld [vmem:[#allocation7 + $0x30] sm:$0xf]
    %v138 = vld [vmem:[#allocation7 + $0x34] sm:$0xf]
    %v139 = vld [vmem:[#allocation7 + $0x38] sm:$0xf]
    %v140 = vld [vmem:[#allocation7 + $0x3c] sm:$0xf]
    %v141 = vld [vmem:[%s4] sm:$0x1]
    %v143 = vperm.slane %v141, 0
    %v161 = vunpack.c.l.b16 %v125
    %v162 = vunpack.c.l.b16 %v126
    %v163 = vunpack.c.l.b16 %v127
    %v164 = vunpack.c.l.b16 %v128
    %v165 = vunpack.c.l.b16 %v129
    %v166 = vunpack.c.l.b16 %v130
    %v167 = vunpack.c.l.b16 %v131
    %v168 = vunpack.c.l.b16 %v132
    %v169 = vunpack.c.l.b16 %v133
    %v170 = vunpack.c.l.b16 %v134
    %v171 = vunpack.c.l.b16 %v135
    %v172 = vunpack.c.l.b16 %v136
    %v173 = vunpack.c.l.b16 %v137
    %v174 = vunpack.c.l.b16 %v138
    %v175 = vunpack.c.l.b16 %v139
    %v176 = vunpack.c.l.b16 %v140
    %v177 = vpack.c.b16 %v162, %v161
    %v178 = vpack.c.b16 %v164, %v163
    %v179 = vpack.c.b16 %v166, %v165
    %v180 = vpack.c.b16 %v168, %v167
    %v181 = vpack.c.b16 %v170, %v169
    %v182 = vpack.c.b16 %v172, %v171
    %v183 = vpack.c.b16 %v174, %v173
    %v184 = vpack.c.b16 %v176, %v175
    %193 = vmatpush.bf16.msra.mxu0 %v184
    %194 = vmatpush.bf16.msra.mxu0 %v183
    %195 = vmatpush.bf16.msra.mxu0 %v182
    %196 = vmatpush.bf16.msra.mxu0 %v181
    %197 = vmatpush.bf16.msra.mxu0 %v180
    %198 = vmatpush.bf16.msra.mxu0 %v179
    %199 = vmatpush.bf16.msra.mxu0 %v178
    %200 = vmatpush.bf16.msra.mxu0 %v177
    %201 = vmatmul.bf16.gmra.mxu0 %v124
    %v202 = vpop.f32.mrf.mxu0
    %v203 = vadd.f32 %v143, %v202
    %v204 = vpop.f32.mrf.mxu0
    %205 = vdwg.mxu0
    %v206 = vmax.f32 %v203, 0.0
    %v207 = vpack.c.bf16 %v206, %v206
    %v208 = vld [vmem:[#allocation8] sm:$0xf]
    %v209 = vld [vmem:[#allocation8 + $0x4] sm:$0xf]
    %v210 = vld [vmem:[#allocation8 + $0x8] sm:$0xf]
    %v211 = vld [vmem:[#allocation8 + $0xc] sm:$0xf]
    %v212 = vld [vmem:[#allocation8 + $0x10] sm:$0xf]
    %v213 = vld [vmem:[#allocation8 + $0x14] sm:$0xf]
    %v214 = vld [vmem:[#allocation8 + $0x18] sm:$0xf]
    %v215 = vld [vmem:[#allocation8 + $0x1c] sm:$0xf]
    %v216 = vld [vmem:[#allocation8 + $0x20] sm:$0xf]
    %v217 = vld [vmem:[#allocation8 + $0x24] sm:$0xf]
    %v218 = vld [vmem:[#allocation8 + $0x28] sm:$0xf]
    %v219 = vld [vmem:[#allocation8 + $0x2c] sm:$0xf]
    %v220 = vld [vmem:[#allocation8 + $0x30] sm:$0xf]
    %v221 = vld [vmem:[#allocation8 + $0x34] sm:$0xf]
    %v222 = vld [vmem:[#allocation8 + $0x38] sm:$0xf]
    %v223 = vld [vmem:[#allocation8 + $0x3c] sm:$0xf]
    %v224 = vld [vmem:[%s6] sm:$0x1]
    %v226 = vperm.slane %v224, 0
    %v244 = vunpack.c.l.b16 %v208
    %v245 = vunpack.c.l.b16 %v209
    %v246 = vunpack.c.l.b16 %v210
    %v247 = vunpack.c.l.b16 %v211
    %v248 = vunpack.c.l.b16 %v212
    %v249 = vunpack.c.l.b16 %v213
    %v250 = vunpack.c.l.b16 %v214
    %v251 = vunpack.c.l.b16 %v215
    %v252 = vunpack.c.l.b16 %v216
    %v253 = vunpack.c.l.b16 %v217
    %v254 = vunpack.c.l.b16 %v218
    %v255 = vunpack.c.l.b16 %v219
    %v256 = vunpack.c.l.b16 %v220
    %v257 = vunpack.c.l.b16 %v221
    %v258 = vunpack.c.l.b16 %v222
    %v259 = vunpack.c.l.b16 %v223
    %v260 = vpack.c.b16 %v245, %v244
    %v261 = vpack.c.b16 %v247, %v246
    %v262 = vpack.c.b16 %v249, %v248
    %v263 = vpack.c.b16 %v251, %v250
    %v264 = vpack.c.b16 %v253, %v252
    %v265 = vpack.c.b16 %v255, %v254
    %v266 = vpack.c.b16 %v257, %v256
    %v267 = vpack.c.b16 %v259, %v258
    %276 = vmatpush.bf16.msra.mxu0 %v267
    %277 = vmatpush.bf16.msra.mxu0 %v266
    %278 = vmatpush.bf16.msra.mxu0 %v265
    %279 = vmatpush.bf16.msra.mxu0 %v264
    %280 = vmatpush.bf16.msra.mxu0 %v263
    %281 = vmatpush.bf16.msra.mxu0 %v262
    %282 = vmatpush.bf16.msra.mxu0 %v261
    %283 = vmatpush.bf16.msra.mxu0 %v260
    %284 = vmatmul.bf16.gmra.mxu0 %v207
    %v285 = vpop.f32.mrf.mxu0
    %v286 = vadd.f32 %v226, %v285
    %v287 = vpop.f32.mrf.mxu0
    %288 = vdwg.mxu0
    %289 = vmax.xlane.f32.xlu0 %v286
    %v290 = vpop.xlane.xlu0 %289
    %v291 = vsub.f32 %v286, %v290
    %v292 = vmul.f32 %v291, 1.442695
    %v293 = vpow.pop %v292
    %294 = vadd.xlane.f32.xlu0 %v293
    %v295 = vpop.xlane.xlu0 %294
    %v296 = vrcp.pop %v295
    %v297 = vmul.f32 %v295, %v296
    %v298 = vsub.f32 1.0, %v297
    %v299 = vmul.f32 %v296, %v298
    %v300 = vadd.f32 %v296, %v299
    %vm301 = vweird.f32 %v295
    %vm302 = vweird.f32 %v296
    %vm303 = vmor %vm301, %vm302
    %v304 = vsel %vm303, %v296, %v300
    %v305 = vand.u32 2147483647, %v295
    %vm306 = vcmp.eq.f32.partialorder %v305, 8.507059e+37
    %v307 = vand.u32 %v295, 2147483648
    %v308 = vor.u32 1.1754944e-38, %v307
    %v309 = vsel %vm306, %v308, %v304
    %v310 = vmul.f32 %v293, %v309
    %311 = vst [vmem:[#allocation10] sm:$0xff] %v310
    // Predicated region
    $region46: #{policy_net_forward.1} parent=1 // pred_check
      _
    $region47: #{policy_net_forward.1} parent=1 // pred_check_branch
      %313 = sbr.rel (0) target = $region49
    $region48: #{policy_net_forward.1} parent=1 // pred_region
      %315 = vsyncadd [#allocation4], 0
      %s317 = sshll.u32 [#allocation10], 4
      %s318 = int_to_ptr.vmem [resolvable:$true] %s317
      %s319 = sshll.u32 %s7, 4
      %s320 = int_to_ptr.hbm [resolvable:$true] %s319
      %322 = dma.vmem_to_hbm [thread:$0]  %s318, 128, %s320, [#allocation4]
    $region49: #{policy_net_forward.1} parent=1 // pred_fallthru
      _
    // Predicated region
    $region50: #{policy_net_forward.1} parent=1 // pred_check
      _
    $region51: #{policy_net_forward.1} parent=1 // pred_check_branch
      %324 = sbr.rel (0) target = $region53
    $region52: #{policy_net_forward.1} parent=1 // pred_region
      %326 = dma.done [#allocation4], 128
    $region53: #{policy_net_forward.1} parent=1 // pred_fallthru
      _
    %327 = vsyncpa [#allocation3], 1
    %328 = vsyncpa [#allocation6], 1
    %329 = vsyncpa [#allocation9], 1
    %330 = vsyncpa [#allocation4], 1

</llo_original>
